<compile_context>
chip_gen: v5e
topology: v5e:2x2
jax: 0.10.0
libtpu: 0.0.40
codegen_flags: <defaults>
</compile_context>

<pallas_src>
import functools
from dataclasses import dataclass

import jax
import jax.numpy as jnp
from jax.experimental import pallas as pl
from jax.experimental.pallas import tpu as pltpu

_LANE = 128


# ---------------------------------------------------------------------------
# generation-aware VMEM budget + tiling helpers
# ---------------------------------------------------------------------------
def _round_up(n, m):
    return ((n + m - 1) // m) * m


def _vmem_budget_bytes():
    """Scoped-VMEM budget per generation (v5e/v6e 128 MiB phys, v7x 64 MiB)."""
    try:
        cap = int(pltpu.get_tpu_info().vmem_capacity_bytes)
    except Exception:
        cap = 64 * 1024 * 1024            # conservative fallback: fits all gens
    return min(int(cap) * 3 // 4, 96 * 1024 * 1024)


def _pick_tm(M):
    # bf16 packs 16 rows / vreg: never split below a 16-row tile; cap at 256
    # rows so acc/f/logits buffers stay bounded and the pipeline gets blocks.
    if M <= 256:
        return M
    for tm in (256, 128, 64, 32, 16):
        if M % tm == 0:
            return tm
    return M


def _fused_vmem_bytes(tm, tk, f_pad, n_pad, emit_f):
    b = 2 * tm * tk * 2            # x tile, double-buffered bf16
    b += 2 * tk * f_pad * 2        # enc_w tile, double-buffered bf16
    b += 2 * f_pad * 4             # enc_b (resident, still 2-buffered)
    b += 2 * f_pad * n_pad * 2     # head_w (resident)
    b += 2 * n_pad * 4             # head_b
    b += 2 * tm * n_pad * 4        # logits out, double-buffered f32
    if emit_f:
        b += 2 * tm * f_pad * 4    # f out
    b += tm * f_pad * 4            # acc scratch (multi-K path)
    return b


def _pick_tk(D, tm, f_pad, n_pad, emit_f, budget):
    # Prefer ONE full-D K block: no reduction grid axis, no acc init/finalize.
    if _fused_vmem_bytes(tm, D, f_pad, n_pad, emit_f) <= budget:
        return D
    best = None
    for tk in (2048, 1024, 512, 256, 128):
        if D % tk == 0:
            best = tk
            if _fused_vmem_bytes(tm, tk, f_pad, n_pad, emit_f) <= budget:
                return tk
    # TODO(synk): also shrink tm when even tk=128 overflows the budget.
    return best if best is not None else D


# ---------------------------------------------------------------------------
# weight prep: pad to lane-dense widths and cast to bf16 ONCE (cached in params)
# ---------------------------------------------------------------------------
def prep_encoder_weights(enc_w, enc_b):
    F = enc_w.shape[1]
    f_pad = _round_up(F, _LANE)
    w = jnp.pad(enc_w, ((0, 0), (0, f_pad - F))).astype(jnp.bfloat16)
    b = jnp.pad(enc_b, ((0, 0), (0, f_pad - F)))            # f32 bias epilogue
    return w, b


def prep_head_weights(ws_bs, F):
    """ws_bs: list of (w [F, n_i], b [1, n_i]); heads fused along N."""
    f_pad = _round_up(F, _LANE)
    w = jnp.concatenate([w for w, _ in ws_bs], axis=1)
    b = jnp.concatenate([b for _, b in ws_bs], axis=1)
    N = w.shape[1]
    n_pad = _round_up(N, _LANE)
    w = jnp.pad(w, ((0, f_pad - F), (0, n_pad - N))).astype(jnp.bfloat16)
    b = jnp.pad(b, ((0, 0), (0, n_pad - N)))
    return w, b


# ---------------------------------------------------------------------------
# Kernel 1: fused encoder (flatten->Linear->ReLU stand-in) + classifier head(s)
# ---------------------------------------------------------------------------
def _enc_heads_kernel_single(emit_f, x_ref, ew_ref, eb_ref, hw_ref, hb_ref,
                             *outs):
    # Single K block: no accumulator, straight-line MXU epilogue.
    if emit_f:
        logits_ref, f_ref = outs
    else:
        (logits_ref,) = outs
    acc = jnp.dot(x_ref[...], ew_ref[...], preferred_element_type=jnp.float32)
    f = jnp.maximum(acc + eb_ref[...], 0.0)                  # f32 epilogue
    if emit_f:
        f_ref[...] = f
    logits_ref[...] = (
        jnp.dot(f.astype(jnp.bfloat16), hw_ref[...],
                preferred_element_type=jnp.float32) + hb_ref[...])


def _enc_heads_kernel_multi(emit_f, x_ref, ew_ref, eb_ref, hw_ref, hb_ref,
                            *outs_scratch):
    if emit_f:
        logits_ref, f_ref, acc_ref = outs_scratch
    else:
        logits_ref, acc_ref = outs_scratch
        f_ref = None
    k = pl.program_id(1)

    @pl.when(k == 0)
    def _():
        acc_ref[...] = jnp.zeros_like(acc_ref)

    acc_ref[...] += jnp.dot(x_ref[...], ew_ref[...],
                            preferred_element_type=jnp.float32)

    @pl.when(k == pl.num_programs(1) - 1)
    def _():
        f = jnp.maximum(acc_ref[...] + eb_ref[...], 0.0)
        if emit_f:
            f_ref[...] = f
        logits_ref[...] = (
            jnp.dot(f.astype(jnp.bfloat16), hw_ref[...],
                    preferred_element_type=jnp.float32) + hb_ref[...])


def fused_encoder_heads(x_bf16, enc_w_kb, enc_b_pad, head_w_kb, head_b_pad,
                        *, emit_f=False):
    """x_bf16 [M,D] bf16; weights pre-padded/cast (lane-dense F_pad / N_pad)."""
    if x_bf16.dtype != jnp.bfloat16:
        x_bf16 = x_bf16.astype(jnp.bfloat16)
    M, D = x_bf16.shape
    f_pad = enc_w_kb.shape[1]
    n_pad = head_w_kb.shape[1]

    budget = _vmem_budget_bytes()
    tm = _pick_tm(M)
    tk = _pick_tk(D, tm, f_pad, n_pad, emit_f, budget)
    single_k = (tk == D)

    if emit_f:
        out_shape = (jax.ShapeDtypeStruct((M, n_pad), jnp.float32),
                     jax.ShapeDtypeStruct((M, f_pad), jnp.float32))
    else:
        out_shape = jax.ShapeDtypeStruct((M, n_pad), jnp.float32)

    if single_k:
        grid = (M // tm,)
        in_specs = [
            pl.BlockSpec((tm, D), lambda m: (m, 0)),       # x
            pl.BlockSpec((D, f_pad), lambda m: (0, 0)),    # enc_w (resident)
            pl.BlockSpec((1, f_pad), lambda m: (0, 0)),    # enc_b
            pl.BlockSpec((f_pad, n_pad), lambda m: (0, 0)),  # head_w
            pl.BlockSpec((1, n_pad), lambda m: (0, 0)),    # head_b
        ]
        if emit_f:
            out_specs = (pl.BlockSpec((tm, n_pad), lambda m: (m, 0)),
                         pl.BlockSpec((tm, f_pad), lambda m: (m, 0)))
        else:
            out_specs = pl.BlockSpec((tm, n_pad), lambda m: (m, 0))
        kernel = functools.partial(_enc_heads_kernel_single, emit_f)
        scratch = []
        dims = ("parallel",)
    else:
        grid = (M // tm, D // tk)
        in_specs = [
            pl.BlockSpec((tm, tk), lambda m, k: (m, k)),       # x
            pl.BlockSpec((tk, f_pad), lambda m, k: (k, 0)),    # enc_w over K
            pl.BlockSpec((1, f_pad), lambda m, k: (0, 0)),     # enc_b
            pl.BlockSpec((f_pad, n_pad), lambda m, k: (0, 0)),  # head_w
            pl.BlockSpec((1, n_pad), lambda m, k: (0, 0)),     # head_b
        ]
        if emit_f:
            out_specs = (pl.BlockSpec((tm, n_pad), lambda m, k: (m, 0)),
                         pl.BlockSpec((tm, f_pad), lambda m, k: (m, 0)))
        else:
            out_specs = pl.BlockSpec((tm, n_pad), lambda m, k: (m, 0))
        kernel = functools.partial(_enc_heads_kernel_multi, emit_f)
        scratch = [pltpu.VMEM((tm, f_pad), jnp.float32)]
        dims = ("parallel", "arbitrary")

    res = pl.pallas_call(
        kernel,
        out_shape=out_shape,
        grid=grid,
        in_specs=in_specs,
        out_specs=out_specs,
        scratch_shapes=scratch,
        compiler_params=pltpu.CompilerParams(
            dimension_semantics=dims,
            vmem_limit_bytes=budget),
    )(x_bf16, enc_w_kb, enc_b_pad, head_w_kb, head_b_pad)

    if emit_f:
        logits, f = res
        return logits, f
    return res, None


# ---------------------------------------------------------------------------
# Kernel 2: DNLL train-mode loss math.
#   input  logits_all [2B,C] : rows [0:B] weak-aug logits, rows [B:2B] strong.
#   outputs:
#     wmax  [B,1]  per-sample max logit (for the w_prev_confidence EMA; the
#                  PyTorch reference uses torch.max(output, dim=1) on logits)
#     stats (4,)   SMEM scalars: [ce_sum, mse_sum, kl_sum, balance_reg]
# TODO(synk): for production batch sizes, tile over the batch axis (partial
#             sums accumulated into the SMEM scalars) and pad C toward 128 so
#             the axis=1 reductions are lane-dense; one block is optimal here.
# ---------------------------------------------------------------------------
def _train_loss_kernel(logits_ref, label_ref, u_ref, v_ref, wmax_ref, stats_ref):
    eps = 1e-4
    M, C = label_ref.shape

    logits = logits_ref[...]
    o = logits[:M, :]        # weak-aug logits
    o1 = logits[M:, :]       # strong-aug logits
    lbl = label_ref[...]

    # softmax(output)
    m = jnp.max(o, axis=1, keepdims=True)
    e = jnp.exp(o - m)
    p = e / jnp.sum(e, axis=1, keepdims=True)

    # U^2 * label, V^2 * (1-label), clamped to [0,1]
    U = jnp.clip(u_ref[...] * u_ref[...] * lbl, 0.0, 1.0)
    V = jnp.clip(v_ref[...] * v_ref[...] * (1.0 - lbl), 0.0, 1.0)

    # prediction = clamp(p + U - V, min=eps); L1 normalize; clamp to [eps, 1]
    pred = jnp.maximum(p + U - V, eps)
    l1 = jnp.sum(jnp.abs(pred), axis=1, keepdims=True)
    pred = pred / jnp.maximum(l1, eps)
    pred = jnp.clip(pred, eps, 1.0)

    ce_sum = jnp.sum(-lbl * jnp.log(pred))

    # hard one-hot of argmax(output) (first-max tie-break, like torch.argmax)
    col = jax.lax.broadcasted_iota(jnp.int32, o.shape, 1)
    first_idx = jnp.min(jnp.where(o == m, col, C), axis=1, keepdims=True)
    hard = (col == first_idx).astype(jnp.float32)
    diff = hard + U - V - lbl
    mse_sum = jnp.sum(diff * diff)

    # consistency KL: sum p * (log p - log_softmax(output1)); F.kl_div zeroes
    # terms where the target probability is exactly 0 -> guard the 0*log(0).
    m1 = jnp.max(o1, axis=1, keepdims=True)
    s1 = o1 - m1
    logp1 = s1 - jnp.log(jnp.sum(jnp.exp(s1), axis=1, keepdims=True))
    kl_terms = jnp.where(p > 0.0,
                         p * (jnp.log(jnp.maximum(p, 1e-38)) - logp1), 0.0)
    kl_sum = jnp.sum(kl_terms)

    # balance regularizer: -sum(prior * log(clamp(mean(pred, 0), eps, 1)))
    avg_pred = jnp.clip(jnp.sum(pred, axis=0, keepdims=True) / M, eps, 1.0)
    balance_reg = -jnp.sum(jnp.log(avg_pred)) / C

    wmax_ref[...] = m                      # max logit, already computed
    stats_ref[0] = ce_sum
    stats_ref[1] = mse_sum
    stats_ref[2] = kl_sum
    stats_ref[3] = balance_reg


def train_loss_forward(logits_all, label, u_g, v_g):
    M, C = label.shape
    return pl.pallas_call(
        _train_loss_kernel,
        out_shape=(jax.ShapeDtypeStruct((M, 1), jnp.float32),
                   jax.ShapeDtypeStruct((4,), jnp.float32)),
        in_specs=[pl.BlockSpec(memory_space=pltpu.MemorySpace.VMEM)] * 4,
        out_specs=(pl.BlockSpec(memory_space=pltpu.MemorySpace.VMEM),
                   pl.BlockSpec(memory_space=pltpu.MemorySpace.SMEM)),
    )(logits_all, label, u_g, v_g)


# ---------------------------------------------------------------------------
# Kernel 3: EMA update (momentum_update_ema), gridded over rows, aliased.
#   Row axis is "parallel" (v7x megacore splits the memory-bound stream);
#   per-tensor calls avoid an extra concat HBM pass over backbone-sized params.
# ---------------------------------------------------------------------------
def _ema_kernel(decay, ema_ref, new_ref, out_ref):
    out_ref[...] = ema_ref[...] * decay + new_ref[...] * (1.0 - decay)


def _pick_ema_rows(R):
    if R <= 512:
        return R
    for tr in (512, 256, 128, 64, 32, 16, 8):
        if R % tr == 0:
            return tr
    return R


def ema_update(ema, new, decay):
    orig_shape = ema.shape
    R = orig_shape[0] if ema.ndim >= 2 else 1
    e2 = ema.reshape(R, -1)
    n2 = new.reshape(R, -1)
    cols = e2.shape[1]
    tr = _pick_ema_rows(R)
    out = pl.pallas_call(
        functools.partial(_ema_kernel, float(decay)),
        out_shape=jax.ShapeDtypeStruct((R, cols), e2.dtype),
        grid=(R // tr,),
        in_specs=[pl.BlockSpec((tr, cols), lambda i: (i, 0))] * 2,
        out_specs=pl.BlockSpec((tr, cols), lambda i: (i, 0)),
        input_output_aliases={0: 0},   # in-place when the buffer is donated
        compiler_params=pltpu.CompilerParams(
            dimension_semantics=("parallel",)),
    )(e2, n2)
    return out.reshape(orig_shape)


# ---------------------------------------------------------------------------
# Parameter setup & model wrapper (plain-JAX glue)
# ---------------------------------------------------------------------------
@dataclass
class Args:
    dr_dim: int = 8
    c: float = 1.0
    reg: float = 1.0
    worst_weight: float = 0.3
    warm_u: int = 100
    warm_up: int = 100
    tau: float = 0.95


def init_params(key, in_dim, num_ftrs, num_classes, dr_dim, num_examp):
    ks = jax.random.split(key, 10)
    scale = 0.02
    p = {
        "enc_w": jax.random.normal(ks[0], (in_dim, num_ftrs), jnp.float32) * scale,
        "enc_b": jnp.zeros((1, num_ftrs), jnp.float32),
        "cfc_w": jax.random.normal(ks[1], (num_ftrs, num_classes), jnp.float32) * scale,
        "cfc_b": jnp.zeros((1, num_classes), jnp.float32),
        "dr_w": jax.random.normal(ks[2], (num_ftrs, dr_dim), jnp.float32) * scale,
        "dr_b": jnp.zeros((1, dr_dim), jnp.float32),
        # init_param(): normal(0, 1e-8)
        "u": jax.random.normal(ks[3], (num_examp, 1), jnp.float32) * 1e-8,
        "v": jax.random.normal(ks[4], (num_examp, num_classes), jnp.float32) * 1e-8,
        "m": jnp.eye(num_classes, dtype=jnp.float32),
        "w_prev_confidence": jnp.ones((num_examp,), jnp.float32) / num_examp,
    }
    # EMA copies of encoder + cfc: EXPLICIT copies (deepcopy at init) so the
    # aliased in-place EMA kernel never overwrites the live weights.
    p["enc_ema_w"] = jnp.array(p["enc_w"], copy=True)
    p["enc_ema_b"] = jnp.array(p["enc_b"], copy=True)
    p["cfc_ema_w"] = jnp.array(p["cfc_w"], copy=True)
    p["cfc_ema_b"] = jnp.array(p["cfc_b"], copy=True)

    # kernel-ready weights: padded to lane-dense widths + bf16, cached once.
    F = num_ftrs
    p["kb_enc_w"], p["kb_enc_b"] = prep_encoder_weights(p["enc_w"], p["enc_b"])
    p["kb_cfc_head_w"], p["kb_cfc_head_b"] = prep_head_weights(
        [(p["cfc_w"], p["cfc_b"])], F)
    p["kb_eval_head_w"], p["kb_eval_head_b"] = prep_head_weights(
        [(p["cfc_w"], p["cfc_b"]), (p["dr_w"], p["dr_b"])], F)
    return p


def _flatten_bf16(img):
    # single fused cast: the fused kernel consumes bf16 MXU operands directly.
    return img.reshape(img.shape[0], -1).astype(jnp.bfloat16)


def dop_forward_eval(params, img, args, use_ema=False):
    """mode == 'eval' (encoder/cfc) or 'test'/'warmup' (EMA encoder/cfc)."""
    F = params["enc_w"].shape[1]
    C = params["cfc_w"].shape[1]
    dr_dim = params["dr_w"].shape[1]
    if use_ema:
        # EMA weights change every train step -> pad/cast at call time.
        enc_w_kb, enc_b_pad = prep_encoder_weights(params["enc_ema_w"],
                                                   params["enc_ema_b"])
        head_w_kb, head_b_pad = prep_head_weights(
            [(params["cfc_ema_w"], params["cfc_ema_b"]),
             (params["dr_w"], params["dr_b"])], F)
    else:
        enc_w_kb, enc_b_pad = params["kb_enc_w"], params["kb_enc_b"]
        head_w_kb, head_b_pad = params["kb_eval_head_w"], params["kb_eval_head_b"]

    logits_pad, f_pad = fused_encoder_heads(
        _flatten_bf16(img), enc_w_kb, enc_b_pad, head_w_kb, head_b_pad,
        emit_f=True)
    f = f_pad[:, :F]
    output = logits_pad[:, :C]
    dr_feature = logits_pad[:, C:C + dr_dim]
    return {"output": output, "feature": f, "feature_dim": f.shape[-1],
            "dr_feature": dr_feature}


def dop_forward_train(params, data, args, epoch=0, momentum=0.99, decay=0.999):
    c_w, c_s, n_w, n_s, c_t, n_t, index, prob_loss = data
    num_classes = params["cfc_w"].shape[1]

    # momentum_update_ema() -- gridded, aliased EMA of encoder + cfc params
    new_params = dict(params)
    for t, e in (("enc_w", "enc_ema_w"), ("enc_b", "enc_ema_b"),
                 ("cfc_w", "cfc_ema_w"), ("cfc_b", "cfc_ema_b")):
        new_params[e] = ema_update(params[e], params[t], decay)

    # weak + strong augmentations batched through ONE fused encoder+cfc pass
    # (dr head skipped in train: its output is unused). Single bf16 concat.
    x_all = jnp.concatenate(
        [_flatten_bf16(c_w), _flatten_bf16(n_w),
         _flatten_bf16(c_s), _flatten_bf16(n_s)], axis=0)
    logits_pad, _ = fused_encoder_heads(
        x_all, params["kb_enc_w"], params["kb_enc_b"],
        params["kb_cfc_head_w"], params["kb_cfc_head_b"], emit_f=False)
    logits_all = logits_pad[:, :num_classes]

    target = jnp.concatenate([c_t, n_t], axis=0)
    label = jax.nn.one_hot(target, num_classes, dtype=jnp.float32)
    M = label.shape[0]
    output = logits_all[:M]                 # weak-aug logits ("cleanoutput")

    # matrix normalization (computed but unused downstream, as in the original)
    m = params["m"]
    _matrix = (m - m.min()) / (m.max() - m.min())

    u_g = params["u"][index]                # [B,1]
    v_g = params["v"][index]                # [B,C]

    wmax, stats = train_loss_forward(logits_all, label, u_g, v_g)
    ce_sum, mse_sum, kl_sum, balance_reg = stats[0], stats[1], stats[2], stats[3]

    loss = ce_sum / M
    mse_loss = mse_sum / M
    consistency_loss = kl_sum / M
    loss_for_kl = args.c * consistency_loss + args.reg * balance_reg

    loss_for_worst = 0.0   # epoch < warm_u + warm_up path
    loss_total_mix = 0.0
    total_loss = loss + mse_loss + args.worst_weight * loss_for_worst \
        + loss_total_mix + loss_for_kl

    # w_prev_confidence EMA from the raw per-sample max logit, matching the
    # reference `torch.max(output.detach(), dim=1)` on the cfc logits.
    prev = params["w_prev_confidence"]
    new_params["w_prev_confidence"] = prev.at[index].set(
        momentum * prev[index] + (1.0 - momentum) * wmax[:, 0])

    loss_dict = {
        "cleanoutput": output, "total_loss": total_loss, "pce": loss,
        "pmse": mse_loss, "loss_worst": 0.3 * loss_for_worst, "target": target,
        "loss_mix": 0.0, "loss_kl": loss_for_kl, "loss_pesudo": 0, "matrix": 0,
    }
    return loss_dict, new_params


# ---------------------------------------------------------------------------
if __name__ == "__main__":
    key = jax.random.PRNGKey(0)

    # small shapes
    num_classes = 16
    num_ftrs = 64
    dr_dim = 8
    num_examp = 256
    C_img, H, W = 3, 16, 16
    in_dim = C_img * H * W
    n_clean, n_noisy = 4, 4
    args = Args(dr_dim=dr_dim)

    kp, k1, k2, k3, k4, k5, k6 = jax.random.split(key, 7)
    params = init_params(kp, in_dim, num_ftrs, num_classes, dr_dim, num_examp)

    c_w = jax.random.normal(k1, (n_clean, C_img, H, W), jnp.float32)
    c_s = jax.random.normal(k2, (n_clean, C_img, H, W), jnp.float32)
    n_w = jax.random.normal(k3, (n_noisy, C_img, H, W), jnp.float32)
    n_s = jax.random.normal(k4, (n_noisy, C_img, H, W), jnp.float32)
    c_t = jax.random.randint(k5, (n_clean,), 0, num_classes, jnp.int32)
    n_t = jax.random.randint(k6, (n_noisy,), 0, num_classes, jnp.int32)
    index = jnp.arange(n_clean + n_noisy, dtype=jnp.int32)
    prob_loss = jnp.concatenate([jnp.zeros((n_clean,), jnp.int32),
                                 jnp.ones((n_noisy,), jnp.int32)])
    data = (c_w, c_s, n_w, n_s, c_t, n_t, index, prob_loss)

    # train mode
    loss_dict, new_params = dop_forward_train(params, data, args, epoch=0)
    jax.block_until_ready(loss_dict["total_loss"])
    jax.block_until_ready(new_params["w_prev_confidence"])
    jax.block_until_ready(new_params["enc_ema_w"])

    # eval mode (encoder + cfc + dr) and test mode (EMA encoder + cfc + dr)
    res_eval = dop_forward_eval(params, c_w, args, use_ema=False)
    res_test = dop_forward_eval(new_params, c_w, args, use_ema=True)
    jax.block_until_ready(res_eval["output"])
    jax.block_until_ready(res_test["dr_feature"])

    assert res_eval["output"].shape == (n_clean, num_classes)
    assert res_eval["dr_feature"].shape == (n_clean, dr_dim)
    assert res_eval["feature"].shape == (n_clean, num_ftrs)
    assert res_test["output"].shape == (n_clean, num_classes)
    assert loss_dict["cleanoutput"].shape == (n_clean + n_noisy, num_classes)
    assert bool(jnp.isfinite(loss_dict["total_loss"]))

    print("KERNEL_OK")
</pallas_src>

<mosaic_0001>
module attributes {stable_mosaic.version = 11 : i64} {
  func.func @_ema_kernel(%arg0: i32, %arg1: memref<256x64xf32, #tpu.memory_space<vmem>>, %arg2: memref<256x64xf32, #tpu.memory_space<vmem>>, %arg3: memref<256x64xf32, #tpu.memory_space<vmem>>) attributes {dimension_semantics = [#tpu.dimension_semantics<parallel>], iteration_bounds = array<i64: 3>, scalar_prefetch = 0 : i64, scratch_operands = 0 : i64, tpu.core_type = #tpu.core_type<tc>, window_params = [{transform_indices = @transform_0, window_bounds = array<i64: 256, 64>}, {transform_indices = @transform_1, window_bounds = array<i64: 256, 64>}, {transform_indices = @transform_2, window_bounds = array<i64: 256, 64>}]} {
    %c0 = arith.constant 0 : index
    %c0_0 = arith.constant 0 : index
    %0 = vector.load %arg1[%c0, %c0_0] : memref<256x64xf32, #tpu.memory_space<vmem>>, vector<256x64xf32>
    %cst = arith.constant 9.990000e-01 : f32
    %1 = vector.broadcast %cst : f32 to vector<256x64xf32>
    %2 = arith.mulf %0, %1 : vector<256x64xf32>
    %c0_1 = arith.constant 0 : index
    %c0_2 = arith.constant 0 : index
    %3 = vector.load %arg2[%c0_1, %c0_2] : memref<256x64xf32, #tpu.memory_space<vmem>>, vector<256x64xf32>
    %cst_3 = arith.constant 1.000000e-03 : f32
    %4 = vector.broadcast %cst_3 : f32 to vector<256x64xf32>
    %5 = arith.mulf %3, %4 : vector<256x64xf32>
    %6 = arith.addf %2, %5 : vector<256x64xf32>
    %c0_4 = arith.constant 0 : index
    %c0_5 = arith.constant 0 : index
    %7 = vector.load %arg3[%c0_4, %c0_5] : memref<256x64xf32, #tpu.memory_space<vmem>>, vector<256x64xf32>
    tpu.vector_store %arg3[%c0_4, %c0_5], %6 {strides = array<i32>} : memref<256x64xf32, #tpu.memory_space<vmem>>, vector<256x64xf32>,
    return
  }
  func.func @transform_0(%arg0: i32) -> (i32, i32) {
    %c0_i32 = arith.constant 0 : i32
    %c0_i32_0 = arith.constant 0 : i32
    return %arg0, %c0_i32 : i32, i32
  }
  func.func @transform_1(%arg0: i32) -> (i32, i32) {
    %c0_i32 = arith.constant 0 : i32
    %c0_i32_0 = arith.constant 0 : i32
    return %arg0, %c0_i32 : i32, i32
  }
  func.func @transform_2(%arg0: i32) -> (i32, i32) {
    %c0_i32 = arith.constant 0 : i32
    %c0_i32_0 = arith.constant 0 : i32
    return %arg0, %c0_i32 : i32, i32
  }
}

</mosaic_0001>

<llo_original>
// kernel: tpu_custom_call.1
$region0: #{tpu_custom_call.1}
  #allocation0 [shape = 'u32[]', space=smem, size = 0x4, offset = 0x4, fixed_abs, tag = 'smem constant byte address 0x4 - core index']
  #allocation1 [shape = 'u32[72,128]{1,0:T(1,128)}', space=vmem, size = 0x9000, scoped, tag = 'internal scratch']
  %s0 = inlined_call_operand.vmem [shape: f32[768,64], index: 0, kind: input, shape index: {}, may-alias: {0,2}]
  %s1 = inlined_call_operand.vmem [shape: f32[768,64], index: 1, kind: input, shape index: {}]
  %s2 = inlined_call_operand.vmem [shape: f32[768,64], index: 2, kind: output, shape index: {}, may-alias: {0,2}]
  %s3 = sld [smem:[#allocation0]]
  $region41: #{tpu_custom_call.1} parent=0
    _
  %s5 = ssub.s32 1, %s3
  %s6 = scalar_select 0, %s5, %s3
  loop: start=0, step=1, limit=5
  $region2: #{tpu_custom_call.1} parent=0 // loop_pre_header
    _
  $region3: #{tpu_custom_call.1} parent=0 // loop_header
    %s8 = sphi 0, %s12
    %p9 = scmp.ge.s32.totalorder %s8, 5
    %s18 = sphi 0, %s20
    %s21 = sphi 0, %s18
    %s22 = sphi 0, %s21
    %s38 = sphi 0, %s22
    %s44 = sphi 0, %s46
    %s47 = sphi 0, %s44
    %s48 = sphi 0, %s47
    %s64 = sphi 0, %s48
    %s70 = sphi 0, %s72
    %s73 = sphi 0, %s70
    %s74 = sphi 0, %s73
    %s90 = sphi 0, %s74
  $region4: #{tpu_custom_call.1} parent=0 // loop_header_branch
    %11 = sbr.rel (%p9) target = $region8
  $region5: #{tpu_custom_call.1} parent=0 // loop_body
    %s13 = ssub.s32 %s8, 1
    %s14 = ssub.s32 %s8, 2
    %s15 = sadd.s32 %s8, 1
    %s16 = ssub.s32 %s8, %s15
    %p17 = scmp.eq.s32.totalorder %s16, 0
    %s19 = sadd.s32 %s18, 1
    %s20 = scalar_select %p17, %s18, %s19
    %p23 = pneg %p17
    %p24 = scmp.eq.s32.totalorder %s8, 2
    %p25 = por %p23, %p24
    %p26 = scmp.ne.s32.totalorder %s18, %s21
    %p27 = scmp.eq.s32.totalorder %s8, 0
    %p28 = por %p26, %p27
    %p29 = scmp.ne.s32.totalorder %s18, %s21
    %p30 = scmp.eq.s32.totalorder %s13, 2
    %p31 = por %p29, %p30
    %p32 = scmp.ne.s32.totalorder %s21, %s22
    %p33 = scmp.eq.s32.totalorder %s13, 0
    %p34 = por %p32, %p33
    %p35 = scmp.ne.s32.totalorder %s21, %s22
    %p36 = scmp.eq.s32.totalorder %s14, 2
    %p37 = por %p35, %p36
    %p39 = scmp.ne.s32.totalorder %s22, %s38
    %p40 = scmp.eq.s32.totalorder %s14, 0
    %p41 = por %p39, %p40
    %s42 = ssub.s32 %s8, %s15
    %p43 = scmp.eq.s32.totalorder %s42, 0
    %s45 = sadd.s32 %s44, 1
    %s46 = scalar_select %p43, %s44, %s45
    %p49 = pneg %p43
    %p50 = scmp.eq.s32.totalorder %s8, 2
    %p51 = por %p49, %p50
    %p52 = scmp.ne.s32.totalorder %s44, %s47
    %p53 = scmp.eq.s32.totalorder %s8, 0
    %p54 = por %p52, %p53
    %p55 = scmp.ne.s32.totalorder %s44, %s47
    %p56 = scmp.eq.s32.totalorder %s13, 2
    %p57 = por %p55, %p56
    %p58 = scmp.ne.s32.totalorder %s47, %s48
    %p59 = scmp.eq.s32.totalorder %s13, 0
    %p60 = por %p58, %p59
    %p61 = scmp.ne.s32.totalorder %s47, %s48
    %p62 = scmp.eq.s32.totalorder %s14, 2
    %p63 = por %p61, %p62
    %p65 = scmp.ne.s32.totalorder %s48, %s64
    %p66 = scmp.eq.s32.totalorder %s14, 0
    %p67 = por %p65, %p66
    %s68 = ssub.s32 %s8, %s15
    %p69 = scmp.eq.s32.totalorder %s68, 0
    %s71 = sadd.s32 %s70, 1
    %s72 = scalar_select %p69, %s70, %s71
    %p75 = pneg %p69
    %p76 = scmp.eq.s32.totalorder %s8, 2
    %p77 = por %p75, %p76
    %p78 = scmp.ne.s32.totalorder %s70, %s73
    %p79 = scmp.eq.s32.totalorder %s8, 0
    %p80 = por %p78, %p79
    %p81 = scmp.ne.s32.totalorder %s70, %s73
    %p82 = scmp.eq.s32.totalorder %s13, 2
    %p83 = por %p81, %p82
    %p84 = scmp.ne.s32.totalorder %s73, %s74
    %p85 = scmp.eq.s32.totalorder %s13, 0
    %p86 = por %p84, %p85
    %p87 = scmp.ne.s32.totalorder %s73, %s74
    %p88 = scmp.eq.s32.totalorder %s14, 2
    %p89 = por %p87, %p88
    %p91 = scmp.ne.s32.totalorder %s74, %s90
    %p92 = scmp.eq.s32.totalorder %s14, 0
    %p93 = por %p91, %p92
    %p94 = scmp.le.s32.totalorder 1, %s8
    %p95 = scmp.lt.s32.totalorder %s8, 4
    %p96 = pnand %p94, %p95
    %p97 = pneg %p96
    // Predicated region
    $region9: #{tpu_custom_call.1} parent=5 // pred_check
      _
    $region10: #{tpu_custom_call.1} parent=5 // pred_check_branch
      %99 = sbr.rel (%p96) target = $region12
    $region11: #{tpu_custom_call.1} parent=5 // pred_region
      %s100 = ssub.s32 %s8, 1
    $region12: #{tpu_custom_call.1} parent=5 // pred_fallthru
      _
    %p101 = scmp.lt.s32.totalorder %s8, 3
    // Predicated region
    $region13: #{tpu_custom_call.1} parent=5 // pred_check
      %p102 = pneg %p101
    $region14: #{tpu_custom_call.1} parent=5 // pred_check_branch
      %104 = sbr.rel (%p102) target = $region16
    $region15: #{tpu_custom_call.1} parent=5 // pred_region
      // Predicated region
      $region17: #{tpu_custom_call.1} parent=15 // pred_check
        %p105 = pneg %p28
      $region18: #{tpu_custom_call.1} parent=15 // pred_check_branch
        %107 = sbr.rel (%p105) target = $region20
      $region19: #{tpu_custom_call.1} parent=15 // pred_region
        %s108 = smul.u32 32, %s8
        %p109 = scmp.lt.s32.totalorder %s108, 95
        %s110 = scalar_select %p109, %s108, 95
        %s111 = smul.addr %s110, 8
        %s112 = scalar_lea.vmem %s0, %s111
        %s113 = smul.u32 32, %s8
      $region20: #{tpu_custom_call.1} parent=15 // pred_fallthru
        _
      // Predicated region
      $region21: #{tpu_custom_call.1} parent=15 // pred_check
        %p114 = pneg %p54
      $region22: #{tpu_custom_call.1} parent=15 // pred_check_branch
        %116 = sbr.rel (%p114) target = $region24
      $region23: #{tpu_custom_call.1} parent=15 // pred_region
        %s117 = smul.u32 32, %s8
        %p118 = scmp.lt.s32.totalorder %s117, 95
        %s119 = scalar_select %p118, %s117, 95
        %s120 = smul.addr %s119, 8
        %s121 = scalar_lea.vmem %s1, %s120
        %s122 = smul.u32 32, %s8
      $region24: #{tpu_custom_call.1} parent=15 // pred_fallthru
        _
    $region16: #{tpu_custom_call.1} parent=5 // pred_fallthru
      _
    %p123 = scmp.le.s32.totalorder 1, %s8
    %p124 = scmp.lt.s32.totalorder %s8, 4
    %p125 = pnand %p123, %p124
    %p126 = pneg %p125
    // Predicated region
    $region25: #{tpu_custom_call.1} parent=5 // pred_check
      _
    $region26: #{tpu_custom_call.1} parent=5 // pred_check_branch
      %128 = sbr.rel (%p125) target = $region28
    $region27: #{tpu_custom_call.1} parent=5 // pred_region
      %s129 = ssub.s32 %s8, 1
      %s130 = smul.u32 32, %s13
      %p131 = scmp.lt.s32.totalorder %s130, 95
      %s132 = scalar_select %p131, %s130, 95
      %s133 = smul.addr %s132, 8
      %s134 = scalar_lea.vmem %s0, %s133
      %p135 = pneg %p34
      %p136 = pneg %p31
      %s137 = smul.u32 32, %s13
      %p138 = scmp.lt.s32.totalorder %s137, 95
      %s139 = scalar_select %p138, %s137, 95
      %s140 = smul.addr %s139, 8
      %s141 = scalar_lea.vmem %s1, %s140
      %p142 = pneg %p60
      %p143 = pneg %p57
      %p144 = pneg %p86
      %p145 = pneg %p83
      %s146 = smul.u32 32, %s13
      %p147 = scmp.lt.s32.totalorder %s146, 95
      %s148 = scalar_select %p147, %s146, 95
      %s149 = smul.addr %s148, 8
      %s150 = scalar_lea.vmem %s2, %s149
      %s151 = smul.u32 32, %s13
      %p152 = scmp.lt.s32.totalorder %s151, 95
      %s153 = scalar_select %p152, %s151, 95
      %s154 = smul.addr %s153, 8
      %s155 = scalar_lea.vmem %s0, %s154
      %s156 = smul.u32 32, %s13
      %s157 = smul.u32 32, %s13
      %p158 = scmp.lt.s32.totalorder %s157, 95
      %s159 = scalar_select %p158, %s157, 95
      %s160 = smul.addr %s159, 8
      %s161 = scalar_lea.vmem %s1, %s160
      %s162 = smul.u32 32, %s13
      %s163 = smul.u32 32, %s13
      %p164 = scmp.lt.s32.totalorder %s163, 95
      %s165 = scalar_select %p164, %s163, 95
      %s166 = smul.addr %s165, 8
      %s167 = scalar_lea.vmem %s2, %s166
      %s168 = smul.u32 32, %s13
      %v169 = vld [vmem:[%s155] sm:$0xff]
      %v170 = vld [vmem:[%s155 + $0x8] sm:$0xff]
      %v171 = vld [vmem:[%s155 + $0x10] sm:$0xff]
      %v172 = vld [vmem:[%s155 + $0x18] sm:$0xff]
      %v173 = vld [vmem:[%s155 + $0x20] sm:$0xff]
      %v174 = vld [vmem:[%s155 + $0x28] sm:$0xff]
      %v175 = vld [vmem:[%s155 + $0x30] sm:$0xff]
      %v176 = vld [vmem:[%s155 + $0x38] sm:$0xff]
      %v177 = vld [vmem:[%s155 + $0x40] sm:$0xff]
      %v178 = vld [vmem:[%s155 + $0x48] sm:$0xff]
      %v179 = vld [vmem:[%s155 + $0x50] sm:$0xff]
      %v180 = vld [vmem:[%s155 + $0x58] sm:$0xff]
      %v181 = vld [vmem:[%s155 + $0x60] sm:$0xff]
      %v182 = vld [vmem:[%s155 + $0x68] sm:$0xff]
      %v183 = vld [vmem:[%s155 + $0x70] sm:$0xff]
      %v184 = vld [vmem:[%s155 + $0x78] sm:$0xff]
      %v185 = vld [vmem:[%s155 + $0x80] sm:$0xff]
      %v186 = vld [vmem:[%s155 + $0x88] sm:$0xff]
      %v187 = vld [vmem:[%s155 + $0x90] sm:$0xff]
      %v188 = vld [vmem:[%s155 + $0x98] sm:$0xff]
      %v189 = vld [vmem:[%s155 + $0xa0] sm:$0xff]
      %v190 = vld [vmem:[%s155 + $0xa8] sm:$0xff]
      %v191 = vld [vmem:[%s155 + $0xb0] sm:$0xff]
      %v192 = vld [vmem:[%s155 + $0xb8] sm:$0xff]
      %v193 = vld [vmem:[%s155 + $0xc0] sm:$0xff]
      %v194 = vld [vmem:[%s155 + $0xc8] sm:$0xff]
      %v195 = vld [vmem:[%s155 + $0xd0] sm:$0xff]
      %v196 = vld [vmem:[%s155 + $0xd8] sm:$0xff]
      %v197 = vld [vmem:[%s155 + $0xe0] sm:$0xff]
      %v198 = vld [vmem:[%s155 + $0xe8] sm:$0xff]
      %v199 = vld [vmem:[%s155 + $0xf0] sm:$0xff]
      %v200 = vld [vmem:[%s155 + $0xf8] sm:$0xff]
      %v201 = vmul.f32 %v169, 0.999
      %v202 = vmul.f32 %v170, 0.999
      %v203 = vmul.f32 %v171, 0.999
      %v204 = vmul.f32 %v172, 0.999
      %v205 = vmul.f32 %v173, 0.999
      %v206 = vmul.f32 %v174, 0.999
      %v207 = vmul.f32 %v175, 0.999
      %v208 = vmul.f32 %v176, 0.999
      %v209 = vmul.f32 %v177, 0.999
      %v210 = vmul.f32 %v178, 0.999
      %v211 = vmul.f32 %v179, 0.999
      %v212 = vmul.f32 %v180, 0.999
      %v213 = vmul.f32 %v181, 0.999
      %v214 = vmul.f32 %v182, 0.999
      %v215 = vmul.f32 %v183, 0.999
      %v216 = vmul.f32 %v184, 0.999
      %v217 = vmul.f32 %v185, 0.999
      %v218 = vmul.f32 %v186, 0.999
      %v219 = vmul.f32 %v187, 0.999
      %v220 = vmul.f32 %v188, 0.999
      %v221 = vmul.f32 %v189, 0.999
      %v222 = vmul.f32 %v190, 0.999
      %v223 = vmul.f32 %v191, 0.999
      %v224 = vmul.f32 %v192, 0.999
      %v225 = vmul.f32 %v193, 0.999
      %v226 = vmul.f32 %v194, 0.999
      %v227 = vmul.f32 %v195, 0.999
      %v228 = vmul.f32 %v196, 0.999
      %v229 = vmul.f32 %v197, 0.999
      %v230 = vmul.f32 %v198, 0.999
      %v231 = vmul.f32 %v199, 0.999
      %v232 = vmul.f32 %v200, 0.999
      %v233 = vld [vmem:[%s161] sm:$0xff]
      %v234 = vld [vmem:[%s161 + $0x8] sm:$0xff]
      %v235 = vld [vmem:[%s161 + $0x10] sm:$0xff]
      %v236 = vld [vmem:[%s161 + $0x18] sm:$0xff]
      %v237 = vld [vmem:[%s161 + $0x20] sm:$0xff]
      %v238 = vld [vmem:[%s161 + $0x28] sm:$0xff]
      %v239 = vld [vmem:[%s161 + $0x30] sm:$0xff]
      %v240 = vld [vmem:[%s161 + $0x38] sm:$0xff]
      %v241 = vld [vmem:[%s161 + $0x40] sm:$0xff]
      %v242 = vld [vmem:[%s161 + $0x48] sm:$0xff]
      %v243 = vld [vmem:[%s161 + $0x50] sm:$0xff]
      %v244 = vld [vmem:[%s161 + $0x58] sm:$0xff]
      %v245 = vld [vmem:[%s161 + $0x60] sm:$0xff]
      %v246 = vld [vmem:[%s161 + $0x68] sm:$0xff]
      %v247 = vld [vmem:[%s161 + $0x70] sm:$0xff]
      %v248 = vld [vmem:[%s161 + $0x78] sm:$0xff]
      %v249 = vld [vmem:[%s161 + $0x80] sm:$0xff]
      %v250 = vld [vmem:[%s161 + $0x88] sm:$0xff]
      %v251 = vld [vmem:[%s161 + $0x90] sm:$0xff]
      %v252 = vld [vmem:[%s161 + $0x98] sm:$0xff]
      %v253 = vld [vmem:[%s161 + $0xa0] sm:$0xff]
      %v254 = vld [vmem:[%s161 + $0xa8] sm:$0xff]
      %v255 = vld [vmem:[%s161 + $0xb0] sm:$0xff]
      %v256 = vld [vmem:[%s161 + $0xb8] sm:$0xff]
      %v257 = vld [vmem:[%s161 + $0xc0] sm:$0xff]
      %v258 = vld [vmem:[%s161 + $0xc8] sm:$0xff]
      %v259 = vld [vmem:[%s161 + $0xd0] sm:$0xff]
      %v260 = vld [vmem:[%s161 + $0xd8] sm:$0xff]
      %v261 = vld [vmem:[%s161 + $0xe0] sm:$0xff]
      %v262 = vld [vmem:[%s161 + $0xe8] sm:$0xff]
      %v263 = vld [vmem:[%s161 + $0xf0] sm:$0xff]
      %v264 = vld [vmem:[%s161 + $0xf8] sm:$0xff]
      %v265 = vmul.f32 %v233, 0.001
      %v266 = vmul.f32 %v234, 0.001
      %v267 = vmul.f32 %v235, 0.001
      %v268 = vmul.f32 %v236, 0.001
      %v269 = vmul.f32 %v237, 0.001
      %v270 = vmul.f32 %v238, 0.001
      %v271 = vmul.f32 %v239, 0.001
      %v272 = vmul.f32 %v240, 0.001
      %v273 = vmul.f32 %v241, 0.001
      %v274 = vmul.f32 %v242, 0.001
      %v275 = vmul.f32 %v243, 0.001
      %v276 = vmul.f32 %v244, 0.001
      %v277 = vmul.f32 %v245, 0.001
      %v278 = vmul.f32 %v246, 0.001
      %v279 = vmul.f32 %v247, 0.001
      %v280 = vmul.f32 %v248, 0.001
      %v281 = vmul.f32 %v249, 0.001
      %v282 = vmul.f32 %v250, 0.001
      %v283 = vmul.f32 %v251, 0.001
      %v284 = vmul.f32 %v252, 0.001
      %v285 = vmul.f32 %v253, 0.001
      %v286 = vmul.f32 %v254, 0.001
      %v287 = vmul.f32 %v255, 0.001
      %v288 = vmul.f32 %v256, 0.001
      %v289 = vmul.f32 %v257, 0.001
      %v290 = vmul.f32 %v258, 0.001
      %v291 = vmul.f32 %v259, 0.001
      %v292 = vmul.f32 %v260, 0.001
      %v293 = vmul.f32 %v261, 0.001
      %v294 = vmul.f32 %v262, 0.001
      %v295 = vmul.f32 %v263, 0.001
      %v296 = vmul.f32 %v264, 0.001
      %v297 = vadd.f32 %v201, %v265
      %v298 = vadd.f32 %v202, %v266
      %v299 = vadd.f32 %v203, %v267
      %v300 = vadd.f32 %v204, %v268
      %v301 = vadd.f32 %v205, %v269
      %v302 = vadd.f32 %v206, %v270
      %v303 = vadd.f32 %v207, %v271
      %v304 = vadd.f32 %v208, %v272
      %v305 = vadd.f32 %v209, %v273
      %v306 = vadd.f32 %v210, %v274
      %v307 = vadd.f32 %v211, %v275
      %v308 = vadd.f32 %v212, %v276
      %v309 = vadd.f32 %v213, %v277
      %v310 = vadd.f32 %v214, %v278
      %v311 = vadd.f32 %v215, %v279
      %v312 = vadd.f32 %v216, %v280
      %v313 = vadd.f32 %v217, %v281
      %v314 = vadd.f32 %v218, %v282
      %v315 = vadd.f32 %v219, %v283
      %v316 = vadd.f32 %v220, %v284
      %v317 = vadd.f32 %v221, %v285
      %v318 = vadd.f32 %v222, %v286
      %v319 = vadd.f32 %v223, %v287
      %v320 = vadd.f32 %v224, %v288
      %v321 = vadd.f32 %v225, %v289
      %v322 = vadd.f32 %v226, %v290
      %v323 = vadd.f32 %v227, %v291
      %v324 = vadd.f32 %v228, %v292
      %v325 = vadd.f32 %v229, %v293
      %v326 = vadd.f32 %v230, %v294
      %v327 = vadd.f32 %v231, %v295
      %v328 = vadd.f32 %v232, %v296
      %vm329 = vcmask 523264
      %330 = vst.msk [vmem:[%s167] sm:$0xff] %vm329, %v297
      %331 = vst.msk [vmem:[%s167 + $0x8] sm:$0xff] %vm329, %v298
      %332 = vst.msk [vmem:[%s167 + $0x10] sm:$0xff] %vm329, %v299
      %333 = vst.msk [vmem:[%s167 + $0x18] sm:$0xff] %vm329, %v300
      %334 = vst.msk [vmem:[%s167 + $0x20] sm:$0xff] %vm329, %v301
      %335 = vst.msk [vmem:[%s167 + $0x28] sm:$0xff] %vm329, %v302
      %336 = vst.msk [vmem:[%s167 + $0x30] sm:$0xff] %vm329, %v303
      %337 = vst.msk [vmem:[%s167 + $0x38] sm:$0xff] %vm329, %v304
      %338 = vst.msk [vmem:[%s167 + $0x40] sm:$0xff] %vm329, %v305
      %339 = vst.msk [vmem:[%s167 + $0x48] sm:$0xff] %vm329, %v306
      %340 = vst.msk [vmem:[%s167 + $0x50] sm:$0xff] %vm329, %v307
      %341 = vst.msk [vmem:[%s167 + $0x58] sm:$0xff] %vm329, %v308
      %342 = vst.msk [vmem:[%s167 + $0x60] sm:$0xff] %vm329, %v309
      %343 = vst.msk [vmem:[%s167 + $0x68] sm:$0xff] %vm329, %v310
      %344 = vst.msk [vmem:[%s167 + $0x70] sm:$0xff] %vm329, %v311
      %345 = vst.msk [vmem:[%s167 + $0x78] sm:$0xff] %vm329, %v312
      %346 = vst.msk [vmem:[%s167 + $0x80] sm:$0xff] %vm329, %v313
      %347 = vst.msk [vmem:[%s167 + $0x88] sm:$0xff] %vm329, %v314
      %348 = vst.msk [vmem:[%s167 + $0x90] sm:$0xff] %vm329, %v315
      %349 = vst.msk [vmem:[%s167 + $0x98] sm:$0xff] %vm329, %v316
      %350 = vst.msk [vmem:[%s167 + $0xa0] sm:$0xff] %vm329, %v317
      %351 = vst.msk [vmem:[%s167 + $0xa8] sm:$0xff] %vm329, %v318
      %352 = vst.msk [vmem:[%s167 + $0xb0] sm:$0xff] %vm329, %v319
      %353 = vst.msk [vmem:[%s167 + $0xb8] sm:$0xff] %vm329, %v320
      %354 = vst.msk [vmem:[%s167 + $0xc0] sm:$0xff] %vm329, %v321
      %355 = vst.msk [vmem:[%s167 + $0xc8] sm:$0xff] %vm329, %v322
      %356 = vst.msk [vmem:[%s167 + $0xd0] sm:$0xff] %vm329, %v323
      %357 = vst.msk [vmem:[%s167 + $0xd8] sm:$0xff] %vm329, %v324
      %358 = vst.msk [vmem:[%s167 + $0xe0] sm:$0xff] %vm329, %v325
      %359 = vst.msk [vmem:[%s167 + $0xe8] sm:$0xff] %vm329, %v326
      %360 = vst.msk [vmem:[%s167 + $0xf0] sm:$0xff] %vm329, %v327
      %361 = vst.msk [vmem:[%s167 + $0xf8] sm:$0xff] %vm329, %v328
      %s362 = smul.u32 32, %s13
      %p363 = scmp.lt.s32.totalorder %s362, 95
      %s364 = scalar_select %p363, %s362, 95
      %s365 = smul.addr %s364, 8
      %s366 = scalar_lea.vmem %s2, %s365
      // Predicated region
      $region29: #{tpu_custom_call.1} parent=27 // pred_check
        %p367 = pneg %p83
      $region30: #{tpu_custom_call.1} parent=27 // pred_check_branch
        %369 = sbr.rel (%p367) target = $region32
      $region31: #{tpu_custom_call.1} parent=27 // pred_region
        %s370 = smul.u32 32, %s13
      $region32: #{tpu_custom_call.1} parent=27 // pred_fallthru
        _
    $region28: #{tpu_custom_call.1} parent=5 // pred_fallthru
      _
    %p371 = scmp.le.s32.totalorder 2, %s8
    // Predicated region
    $region33: #{tpu_custom_call.1} parent=5 // pred_check
      %p372 = pneg %p371
    $region34: #{tpu_custom_call.1} parent=5 // pred_check_branch
      %374 = sbr.rel (%p372) target = $region36
    $region35: #{tpu_custom_call.1} parent=5 // pred_region
      %s375 = ssub.s32 %s8, 2
      // Predicated region
      $region37: #{tpu_custom_call.1} parent=35 // pred_check
        %p376 = pneg %p89
      $region38: #{tpu_custom_call.1} parent=35 // pred_check_branch
        %378 = sbr.rel (%p376) target = $region40
      $region39: #{tpu_custom_call.1} parent=35 // pred_region
        %s379 = smul.u32 32, %s14
        %p380 = scmp.lt.s32.totalorder %s379, 95
        %s381 = scalar_select %p380, %s379, 95
        %s382 = smul.addr %s381, 8
        %s383 = scalar_lea.vmem %s2, %s382
      $region40: #{tpu_custom_call.1} parent=35 // pred_fallthru
        _
    $region36: #{tpu_custom_call.1} parent=5 // pred_fallthru
      _
  $region6: #{tpu_custom_call.1} parent=0 // loop_footer
    %s12 = sadd.s32 1, %s8
  $region7: #{tpu_custom_call.1} parent=0 // loop_footer_branch
    %7 = sbr.rel target = $region3
  $region8: #{tpu_custom_call.1} parent=0 // loop_exit
    _

</llo_original>
